<compile_context>
chip_gen: v6e
topology: v6e:2x2x1
jax: 0.10.0
libtpu: 0.0.40
codegen_flags: <defaults>
</compile_context>

<pallas_src>
import functools
import math

import jax
import jax.numpy as jnp
from jax.experimental import pallas as pl
from jax.experimental.pallas import tpu as pltpu

NUM_CLUSTERS = 3
INPUT_DIM = 5
HIDDEN_DIM = 10
OUTPUT_DIM = 5
KD = NUM_CLUSTERS * INPUT_DIM          # 15 stacked cluster*dim rows
EPS = 1e-3
LANE = 128


def _cdiv(a, b):
    return -(-a // b)


def _round_up(a, b):
    return _cdiv(a, b) * b


def mymodel_kernel(x_ref, c_ref, w1b_ref, w2b_ref, out_ref,
                   *, batch, tile, mask_tail):
    """One batch tile of the full forward pass.

    x_ref   : (INPUT_DIM, tile)   batch-on-lanes activations
    c_ref   : (KD, 4)             columns = [mu | -0.5/(var+eps) |
                                   prior*rsqrt(var+eps)/sqrt(2pi) |
                                   prior/((var+eps)*sqrt(2pi))]
    w1b_ref : (HIDDEN_DIM, INPUT_DIM+1)   [w1 | b1]
    w2b_ref : (OUTPUT_DIM, HIDDEN_DIM+1)  [w2 | b2]
    out_ref : (OUTPUT_DIM, tile)
    """
    x = x_ref[...]                                           # (D, tb)

    if mask_tail:
        # Zero-fill garbage lanes of the ragged final tile (per-lane model:
        # invalid lanes never contaminate valid ones; this just keeps them
        # finite and the OOB output columns are dropped by Pallas anyway).
        col = pl.program_id(0) * tile + jax.lax.broadcasted_iota(
            jnp.int32, (1, tile), 1)
        x = jnp.where(col < batch, x, 0.0)

    c = c_ref[...]                                           # (KD, 4)
    mu = c[:, 0:1]
    neg_half_inv_var = c[:, 1:2]
    coef_den = c[:, 2:3]                                     # prior*rsqrt/sqrt(2pi)
    coef_num = c[:, 3:4]                                     # coef_den * rsqrt(var+eps)

    # ---- UCBNorm: all 3 clusters stacked on sublanes -> one exp / one pass ----
    x3 = jnp.concatenate([x] * NUM_CLUSTERS, axis=0)         # (15, tb)
    diff = x3 - mu
    e = jnp.exp(diff * diff * neg_half_inv_var)              # single EUP pass
    wn = coef_num * e * diff                                 # numerator terms
    wd = coef_den * e                                        # denominator terms

    num = (wn[0:INPUT_DIM, :] + wn[INPUT_DIM:2 * INPUT_DIM, :]
           + wn[2 * INPUT_DIM:3 * INPUT_DIM, :])             # (5, tb)
    den = (wd[0:INPUT_DIM, :] + wd[INPUT_DIM:2 * INPUT_DIM, :]
           + wd[2 * INPUT_DIM:3 * INPUT_DIM, :])             # (5, tb)
    x_norm = num * pl.reciprocal(den + EPS, approx=True)     # EUP approx rcp

    # ---- hidden layer + ReLU (MXU: (10,5)@(5,tb)) ----
    w1b = w1b_ref[...]
    h = jnp.dot(w1b[:, :INPUT_DIM], x_norm,
                preferred_element_type=jnp.float32) + w1b[:, INPUT_DIM:]
    h = jnp.maximum(h, 0.0)

    # ---- output layer + softmax over features (axis 0 here) ----
    w2b = w2b_ref[...]
    logits = jnp.dot(w2b[:, :HIDDEN_DIM], h,
                     preferred_element_type=jnp.float32) + w2b[:, HIDDEN_DIM:]
    m = jnp.max(logits, axis=0, keepdims=True)
    e2 = jnp.exp(logits - m)
    # exact reciprocal for the final normalization so rows sum to 1 exactly
    out_ref[...] = e2 * (1.0 / jnp.sum(e2, axis=0, keepdims=True))


def mymodel_forward(x, params, *, batch_tile=32768):
    B, D = x.shape
    assert D == INPUT_DIM
    prior, mu, var, w1, b1, w2, b2 = params

    # ---- fold all per-cluster constants in the wrapper (45 scalars total) ----
    var_e = (var + EPS).astype(jnp.float32)                       # (K, D)
    inv_std = jax.lax.rsqrt(var_e)                                # rsqrt(var+eps)
    coef_den = prior * inv_std / jnp.float32(math.sqrt(2.0 * math.pi))
    coef_num = coef_den * inv_std                                 # prior/((var+eps)*sqrt(2pi))
    neg_half_inv_var = -0.5 / var_e

    stack = lambda a: a.reshape(KD, 1).astype(jnp.float32)        # cluster-major rows
    consts = jnp.concatenate(
        [stack(jnp.broadcast_to(mu, (NUM_CLUSTERS, INPUT_DIM))),
         stack(neg_half_inv_var), stack(coef_den), stack(coef_num)], axis=1)  # (15, 4)

    w1b = jnp.concatenate([w1, b1.reshape(-1, 1)], axis=1).astype(jnp.float32)  # (10, 6)
    w2b = jnp.concatenate([w2, b2.reshape(-1, 1)], axis=1).astype(jnp.float32)  # (5, 11)

    # ---- batch-on-lanes; no full-batch pad materialization ----
    xT = x.T.astype(jnp.float32)                              # (D, B)
    B_arr = B
    if B_arr < LANE:
        # tiny batches only: pad to one lane (<= 127 cols, negligible traffic)
        xT = jnp.pad(xT, ((0, 0), (0, LANE - B_arr)))
        B_arr = LANE

    tb = min(int(batch_tile), B_arr)
    tb = _round_up(tb, LANE)
    n_tiles = _cdiv(B_arr, tb)
    if n_tiles > 1 and n_tiles % 2 == 1:
        # keep the grid even so both v7x TensorCores get work
        tb_alt = _round_up(_cdiv(B_arr, n_tiles + 1), LANE)
        if tb_alt >= LANE and _cdiv(B_arr, tb_alt) % 2 == 0:
            tb = tb_alt
            n_tiles = _cdiv(B_arr, tb)
    needs_mask = (B_arr % tb) != 0

    kernel = functools.partial(mymodel_kernel, batch=B_arr, tile=tb,
                               mask_tail=needs_mask)

    full = lambda i: (0, 0)
    tiled = lambda i: (0, i)

    outT = pl.pallas_call(
        kernel,
        out_shape=jax.ShapeDtypeStruct((OUTPUT_DIM, B_arr), jnp.float32),
        grid=(n_tiles,),
        in_specs=[
            pl.BlockSpec((INPUT_DIM, tb), tiled),                 # x  (D, tb)
            pl.BlockSpec((KD, 4), full),                          # GMM constants
            pl.BlockSpec((HIDDEN_DIM, INPUT_DIM + 1), full),      # [w1|b1]
            pl.BlockSpec((OUTPUT_DIM, HIDDEN_DIM + 1), full),     # [w2|b2]
        ],
        out_specs=pl.BlockSpec((OUTPUT_DIM, tb), tiled),
        compiler_params=pltpu.CompilerParams(
            dimension_semantics=("parallel",),
            vmem_limit_bytes=48 * 1024 * 1024,
        ),
    )(xT, consts, w1b, w2b)

    # I/O contract of the PyTorch module is (B, 5); this final transpose is the
    # only remaining layout op (the old full-batch zero-pad is gone).
    return outT[:, :B].T


def init_params(key):
    k1, k2, k3, k4, k5, k6 = jax.random.split(key, 6)
    # UCBNorm parameters
    prior = jnp.full((NUM_CLUSTERS, 1), 1.0 / NUM_CLUSTERS, dtype=jnp.float32)
    mu = jax.random.normal(k1, (NUM_CLUSTERS, INPUT_DIM), dtype=jnp.float32)
    var = jax.random.uniform(k2, (NUM_CLUSTERS, INPUT_DIM),
                             minval=0.1, maxval=1.0, dtype=jnp.float32)
    # hidden_layer: PyTorch Linear(5, 10) -> weight (10, 5), bias (10,)
    lim1 = 1.0 / math.sqrt(INPUT_DIM)
    w1 = jax.random.uniform(k3, (HIDDEN_DIM, INPUT_DIM),
                            minval=-lim1, maxval=lim1, dtype=jnp.float32)
    b1 = jax.random.uniform(k4, (HIDDEN_DIM,),
                            minval=-lim1, maxval=lim1, dtype=jnp.float32)
    # output_layer: PyTorch Linear(10, 5) -> weight (5, 10), bias (5,)
    lim2 = 1.0 / math.sqrt(HIDDEN_DIM)
    w2 = jax.random.uniform(k5, (OUTPUT_DIM, HIDDEN_DIM),
                            minval=-lim2, maxval=lim2, dtype=jnp.float32)
    b2 = jax.random.uniform(k6, (OUTPUT_DIM,),
                            minval=-lim2, maxval=lim2, dtype=jnp.float32)
    return prior, mu, var, w1, b1, w2, b2


def reference_forward(x, params):
    """Pure-JAX reference of the same forward for a sanity check."""
    prior, mu, var, w1, b1, w2, b2 = params
    diff = x[:, None, :] - mu[None, :, :]                         # (B, K, D)
    var_e = var[None, :, :] + EPS
    pdf = jnp.exp(-0.5 * diff ** 2 / var_e) / jnp.sqrt(2 * math.pi * var_e)
    w = prior[None, :, :] * pdf
    x_norm = jnp.sum(w * diff / jnp.sqrt(var_e), axis=1) / (jnp.sum(w, axis=1) + EPS)
    h = jax.nn.relu(x_norm @ w1.T + b1)
    return jax.nn.softmax(h @ w2.T + b2, axis=1)


if __name__ == "__main__":
    key = jax.random.PRNGKey(0)
    pkey, xkey, xkey2 = jax.random.split(key, 3)
    params = init_params(pkey)

    # small demo batch (single 128-lane tile, single grid step)
    B = 8
    x = jax.random.normal(xkey, (B, INPUT_DIM), dtype=jnp.float32)
    out = jax.block_until_ready(mymodel_forward(x, params))
    ref = reference_forward(x, params)
    assert out.shape == (B, OUTPUT_DIM)
    # approx reciprocal in the UCBNorm denominator -> slightly loose tolerance
    assert jnp.allclose(out, ref, atol=2e-3, rtol=2e-3)
    # final softmax normalization is exact -> rows sum to 1 tightly
    assert jnp.allclose(jnp.sum(out, axis=1), jnp.ones((B,)), atol=1e-5)

    # non-multiple batch exercises the ragged final tile + 2-step parallel grid
    B2 = 300
    x2 = jax.random.normal(xkey2, (B2, INPUT_DIM), dtype=jnp.float32)
    out2 = jax.block_until_ready(mymodel_forward(x2, params, batch_tile=256))
    ref2 = reference_forward(x2, params)
    assert out2.shape == (B2, OUTPUT_DIM)
    assert jnp.allclose(out2, ref2, atol=2e-3, rtol=2e-3)

    print("KERNEL_OK")
</pallas_src>

<mosaic_0001>
module attributes {stable_mosaic.version = 11 : i64} {
  func.func @mymodel_kernel(%arg0: i32, %arg1: memref<5x128xf32, #tpu.memory_space<vmem>>, %arg2: memref<15x4xf32, #tpu.memory_space<vmem>>, %arg3: memref<10x6xf32, #tpu.memory_space<vmem>>, %arg4: memref<5x11xf32, #tpu.memory_space<vmem>>, %arg5: memref<5x128xf32, #tpu.memory_space<vmem>>) attributes {dimension_semantics = [#tpu.dimension_semantics<parallel>], iteration_bounds = array<i64: 1>, scalar_prefetch = 0 : i64, scratch_operands = 0 : i64, tpu.core_type = #tpu.core_type<tc>, window_params = [{transform_indices = @transform_0, window_bounds = array<i64: 5, 128>}, {pipeline_mode = #tpu.pipeline_mode<synchronous>, transform_indices = @transform_1, window_bounds = array<i64: 15, 4>}, {pipeline_mode = #tpu.pipeline_mode<synchronous>, transform_indices = @transform_2, window_bounds = array<i64: 10, 6>}, {pipeline_mode = #tpu.pipeline_mode<synchronous>, transform_indices = @transform_3, window_bounds = array<i64: 5, 11>}, {transform_indices = @transform_4, window_bounds = array<i64: 5, 128>}]} {
    %c0 = arith.constant 0 : index
    %c0_0 = arith.constant 0 : index
    %0 = vector.load %arg1[%c0, %c0_0] : memref<5x128xf32, #tpu.memory_space<vmem>>, vector<5x128xf32>
    %c0_1 = arith.constant 0 : index
    %c0_2 = arith.constant 0 : index
    %1 = vector.load %arg2[%c0_1, %c0_2] : memref<15x4xf32, #tpu.memory_space<vmem>>, vector<15x4xf32>
    %2 = vector.extract_strided_slice %1 {offsets = [0, 0], sizes = [15, 1], strides = [1, 1]} : vector<15x4xf32> to vector<15x1xf32>
    %3 = vector.extract_strided_slice %1 {offsets = [0, 1], sizes = [15, 1], strides = [1, 1]} : vector<15x4xf32> to vector<15x1xf32>
    %4 = vector.extract_strided_slice %1 {offsets = [0, 2], sizes = [15, 1], strides = [1, 1]} : vector<15x4xf32> to vector<15x1xf32>
    %5 = vector.extract_strided_slice %1 {offsets = [0, 3], sizes = [15, 1], strides = [1, 1]} : vector<15x4xf32> to vector<15x1xf32>
    %6 = tpu.concatenate %0, %0, %0 in 0 : vector<5x128xf32>, vector<5x128xf32>, vector<5x128xf32> -> vector<15x128xf32>
    %7 = vector.broadcast %2 : vector<15x1xf32> to vector<15x128xf32>
    %8 = arith.subf %6, %7 : vector<15x128xf32>
    %9 = arith.mulf %8, %8 : vector<15x128xf32>
    %10 = vector.broadcast %3 : vector<15x1xf32> to vector<15x128xf32>
    %11 = arith.mulf %9, %10 : vector<15x128xf32>
    %12 = math.exp %11 : vector<15x128xf32>
    %13 = vector.broadcast %5 : vector<15x1xf32> to vector<15x128xf32>
    %14 = arith.mulf %13, %12 : vector<15x128xf32>
    %15 = arith.mulf %14, %8 : vector<15x128xf32>
    %16 = vector.broadcast %4 : vector<15x1xf32> to vector<15x128xf32>
    %17 = arith.mulf %16, %12 : vector<15x128xf32>
    %18 = vector.extract_strided_slice %15 {offsets = [0, 0], sizes = [5, 128], strides = [1, 1]} : vector<15x128xf32> to vector<5x128xf32>
    %19 = vector.extract_strided_slice %15 {offsets = [5, 0], sizes = [5, 128], strides = [1, 1]} : vector<15x128xf32> to vector<5x128xf32>
    %20 = arith.addf %18, %19 : vector<5x128xf32>
    %21 = vector.extract_strided_slice %15 {offsets = [10, 0], sizes = [5, 128], strides = [1, 1]} : vector<15x128xf32> to vector<5x128xf32>
    %22 = arith.addf %20, %21 : vector<5x128xf32>
    %23 = vector.extract_strided_slice %17 {offsets = [0, 0], sizes = [5, 128], strides = [1, 1]} : vector<15x128xf32> to vector<5x128xf32>
    %24 = vector.extract_strided_slice %17 {offsets = [5, 0], sizes = [5, 128], strides = [1, 1]} : vector<15x128xf32> to vector<5x128xf32>
    %25 = arith.addf %23, %24 : vector<5x128xf32>
    %26 = vector.extract_strided_slice %17 {offsets = [10, 0], sizes = [5, 128], strides = [1, 1]} : vector<15x128xf32> to vector<5x128xf32>
    %27 = arith.addf %25, %26 : vector<5x128xf32>
    %cst = arith.constant 1.000000e-03 : f32
    %28 = vector.broadcast %cst : f32 to vector<5x128xf32>
    %29 = arith.addf %27, %28 : vector<5x128xf32>
    %30 = tpu.reciprocal %29 {approx = true} : vector<5x128xf32> -> vector<5x128xf32>
    %31 = arith.mulf %22, %30 : vector<5x128xf32>
    %c0_3 = arith.constant 0 : index
    %c0_4 = arith.constant 0 : index
    %32 = vector.load %arg3[%c0_3, %c0_4] : memref<10x6xf32, #tpu.memory_space<vmem>>, vector<10x6xf32>
    %33 = vector.extract_strided_slice %32 {offsets = [0, 0], sizes = [10, 5], strides = [1, 1]} : vector<10x6xf32> to vector<10x5xf32>
    %cst_5 = arith.constant dense<0.000000e+00> : vector<10x128xf32>
    %34 = tpu.matmul %33, %31, %cst_5 {dimension_numbers = #tpu.dot_dimension_numbers<[1], [0], [0], [1], [0, 0, 1, 1], [], []>} : vector<10x5xf32>, vector<5x128xf32>, vector<10x128xf32> -> vector<10x128xf32>
    %35 = vector.extract_strided_slice %32 {offsets = [0, 5], sizes = [10, 1], strides = [1, 1]} : vector<10x6xf32> to vector<10x1xf32>
    %36 = vector.broadcast %35 : vector<10x1xf32> to vector<10x128xf32>
    %37 = arith.addf %34, %36 : vector<10x128xf32>
    %cst_6 = arith.constant 0.000000e+00 : f32
    %38 = vector.broadcast %cst_6 : f32 to vector<10x128xf32>
    %39 = arith.maximumf %37, %38 : vector<10x128xf32>
    %c0_7 = arith.constant 0 : index
    %c0_8 = arith.constant 0 : index
    %40 = vector.load %arg4[%c0_7, %c0_8] : memref<5x11xf32, #tpu.memory_space<vmem>>, vector<5x11xf32>
    %41 = vector.extract_strided_slice %40 {offsets = [0, 0], sizes = [5, 10], strides = [1, 1]} : vector<5x11xf32> to vector<5x10xf32>
    %cst_9 = arith.constant dense<0.000000e+00> : vector<5x128xf32>
    %42 = tpu.matmul %41, %39, %cst_9 {dimension_numbers = #tpu.dot_dimension_numbers<[1], [0], [0], [1], [0, 0, 1, 1], [], []>} : vector<5x10xf32>, vector<10x128xf32>, vector<5x128xf32> -> vector<5x128xf32>
    %43 = vector.extract_strided_slice %40 {offsets = [0, 10], sizes = [5, 1], strides = [1, 1]} : vector<5x11xf32> to vector<5x1xf32>
    %44 = vector.broadcast %43 : vector<5x1xf32> to vector<5x128xf32>
    %45 = arith.addf %42, %44 : vector<5x128xf32>
    %cst_10 = arith.constant dense<0xFF800000> : vector<128xf32>
    %46 = vector.multi_reduction <maximumf>, %45, %cst_10 [0] : vector<5x128xf32> to vector<128xf32>
    %47 = vector.shape_cast %46 : vector<128xf32> to vector<1x128xf32>
    %48 = vector.broadcast %47 : vector<1x128xf32> to vector<5x128xf32>
    %49 = arith.subf %45, %48 : vector<5x128xf32>
    %50 = math.exp %49 : vector<5x128xf32>
    %cst_11 = arith.constant dense<0.000000e+00> : vector<128xf32>
    %51 = vector.multi_reduction <add>, %50, %cst_11 [0] : vector<5x128xf32> to vector<128xf32>
    %52 = vector.shape_cast %51 : vector<128xf32> to vector<1x128xf32>
    %cst_12 = arith.constant 1.000000e+00 : f32
    %53 = vector.broadcast %cst_12 : f32 to vector<1x128xf32>
    %54 = arith.divf %53, %52 : vector<1x128xf32>
    %55 = vector.broadcast %54 : vector<1x128xf32> to vector<5x128xf32>
    %56 = arith.mulf %50, %55 : vector<5x128xf32>
    %c0_13 = arith.constant 0 : index
    %c0_14 = arith.constant 0 : index
    %57 = vector.load %arg5[%c0_13, %c0_14] : memref<5x128xf32, #tpu.memory_space<vmem>>, vector<5x128xf32>
    tpu.vector_store %arg5[%c0_13, %c0_14], %56 {strides = array<i32>} : memref<5x128xf32, #tpu.memory_space<vmem>>, vector<5x128xf32>,
    return
  }
  func.func @transform_0(%arg0: i32) -> (i32, i32) {
    %c0_i32 = arith.constant 0 : i32
    %c0_i32_0 = arith.constant 0 : i32
    return %c0_i32, %arg0 : i32, i32
  }
  func.func @transform_1(%arg0: i32) -> (i32, i32) {
    %c0_i32 = arith.constant 0 : i32
    %c0_i32_0 = arith.constant 0 : i32
    %c0_i32_1 = arith.constant 0 : i32
    return %c0_i32, %c0_i32_0 : i32, i32
  }
  func.func @transform_2(%arg0: i32) -> (i32, i32) {
    %c0_i32 = arith.constant 0 : i32
    %c0_i32_0 = arith.constant 0 : i32
    %c0_i32_1 = arith.constant 0 : i32
    return %c0_i32, %c0_i32_0 : i32, i32
  }
  func.func @transform_3(%arg0: i32) -> (i32, i32) {
    %c0_i32 = arith.constant 0 : i32
    %c0_i32_0 = arith.constant 0 : i32
    %c0_i32_1 = arith.constant 0 : i32
    return %c0_i32, %c0_i32_0 : i32, i32
  }
  func.func @transform_4(%arg0: i32) -> (i32, i32) {
    %c0_i32 = arith.constant 0 : i32
    %c0_i32_0 = arith.constant 0 : i32
    return %c0_i32, %arg0 : i32, i32
  }
}

</mosaic_0001>

<llo_original>
// kernel: tpu_custom_call.1
$region0: #{tpu_custom_call.1}
  #allocation0 [shape = 'u32[]', space=smem, size = 0x4, offset = 0x4, fixed_abs, tag = 'smem constant byte address 0x4 - core index']
  #allocation1 [shape = 'u32[144,128]{1,0:T(1,128)}', space=vmem, size = 0x12000, scoped, tag = 'internal scratch']
  %s0 = inlined_call_operand.vmem [shape: f32[5,128], index: 0, kind: input, shape index: {}]
  %s1 = inlined_call_operand.vmem [shape: f32[15,4], index: 1, kind: input, shape index: {}]
  %s2 = inlined_call_operand.vmem [shape: f32[10,6], index: 2, kind: input, shape index: {}]
  %s3 = inlined_call_operand.vmem [shape: f32[5,11], index: 3, kind: input, shape index: {}]
  %s4 = inlined_call_operand.hbm [shape: f32[5,128], index: 4, kind: output, shape index: {}]
  %s5 = sld [smem:[#allocation0]]
  $region26: #{tpu_custom_call.1} parent=0
    _
  %s7 = ssub.s32 1, %s5
  %s8 = scalar_select 0, %s7, %s5
  $region1: #{tpu_custom_call.1} parent=0
    #allocation2 [shape = 'u8[4096]{0}', space=vmem, size = 0x1000, scoped, tag = 'output window, operand 0, single buffered']
    #allocation3 [shape = 's32[1]{0}', space=sflag, size = 0x4, scoped, tag = 'scoped memory for tpu_custom_call.1']
    %9 = vsyncpa [#allocation3], 0
    // Predicated region
    $region2: #{tpu_custom_call.1} parent=1 // pred_check
      _
    $region3: #{tpu_custom_call.1} parent=1 // pred_check_branch
      %11 = sbr.rel (0) target = $region5
    $region4: #{tpu_custom_call.1} parent=1 // pred_region
      _
    $region5: #{tpu_custom_call.1} parent=1 // pred_fallthru
      _
    // Predicated region
    $region6: #{tpu_custom_call.1} parent=1 // pred_check
      _
    $region7: #{tpu_custom_call.1} parent=1 // pred_check_branch
      %13 = sbr.rel (0) target = $region9
    $region8: #{tpu_custom_call.1} parent=1 // pred_region
      _
    $region9: #{tpu_custom_call.1} parent=1 // pred_fallthru
      _
    // Predicated region
    $region10: #{tpu_custom_call.1} parent=1 // pred_check
      _
    $region11: #{tpu_custom_call.1} parent=1 // pred_check_branch
      %15 = sbr.rel (0) target = $region13
    $region12: #{tpu_custom_call.1} parent=1 // pred_region
      _
    $region13: #{tpu_custom_call.1} parent=1 // pred_fallthru
      _
    // Predicated region
    $region14: #{tpu_custom_call.1} parent=1 // pred_check
      _
    $region15: #{tpu_custom_call.1} parent=1 // pred_check_branch
      %17 = sbr.rel (0) target = $region17
    $region16: #{tpu_custom_call.1} parent=1 // pred_region
      _
    $region17: #{tpu_custom_call.1} parent=1 // pred_fallthru
      _
    %v18 = vld [vmem:[%s0] sm:$0x1f]
    %v19 = vld [vmem:[%s1] sm:$0xff]
    %v20 = vld [vmem:[%s1 + $0x8] sm:$0x7f]
    %v22 = vrot.slane %v18, 3
    %v24 = vrot.slane %v18, 6
    %vm26 = vcmask 1044480
    %v27 = vsel %vm26, %v18, %v22
    %vm28 = vcmask 1041408
    %v29 = vsel %vm28, %v22, %v24
    %31 = vset.pattern.permute.xlu0 0
    %32 = vperm.xlu0 %31, %v19
    %v33 = vpop.permute.xlu0 %32
    %36 = vset.pattern.permute.xlu0 0
    %37 = vperm.xlu0 %36, %v20
    %v38 = vpop.permute.xlu0 %37
    %v40 = vsub.f32 %v27, %v33
    %v41 = vsub.f32 %v29, %v38
    %v42 = vmul.f32 %v40, %v40
    %v43 = vmul.f32 %v41, %v41
    %44 = vset.pattern.permute.xlu0 1
    %45 = vperm.xlu0 %44, %v19
    %v46 = vpop.permute.xlu0 %45
    %48 = vset.pattern.permute.xlu0 1
    %49 = vperm.xlu0 %48, %v20
    %v50 = vpop.permute.xlu0 %49
    %v52 = vmul.f32 %v42, %v46
    %v53 = vmul.f32 %v43, %v50
    %v54 = vmul.f32 %v52, 1.442695
    %v55 = vpow.pop %v54
    %v56 = vmul.f32 %v53, 1.442695
    %v57 = vpow.pop %v56
    %58 = vset.pattern.permute.xlu0 3
    %59 = vperm.xlu0 %58, %v19
    %v60 = vpop.permute.xlu0 %59
    %62 = vset.pattern.permute.xlu0 3
    %63 = vperm.xlu0 %62, %v20
    %v64 = vpop.permute.xlu0 %63
    %v66 = vmul.f32 %v60, %v55
    %v67 = vmul.f32 %v64, %v57
    %v68 = vmul.f32 %v66, %v40
    %v69 = vmul.f32 %v67, %v41
    %70 = vset.pattern.permute.xlu0 2
    %71 = vperm.xlu0 %70, %v19
    %v72 = vpop.permute.xlu0 %71
    %74 = vset.pattern.permute.xlu0 2
    %75 = vperm.xlu0 %74, %v20
    %v76 = vpop.permute.xlu0 %75
    %v78 = vmul.f32 %v72, %v55
    %v79 = vmul.f32 %v76, %v57
    %vm82 = vcmask 1042432
    %v83 = vrot.slane %v68, 5
    %v84 = vrot.slane %v69, 5
    %v85 = vsel %vm82, %v83, %v84
    %v87 = vadd.f32 %v68, %v85
    %v88 = vrot.slane %v69, 2
    %v90 = vadd.f32 %v87, %v88
    %v93 = vrot.slane %v78, 5
    %v94 = vrot.slane %v79, 5
    %v95 = vsel %vm82, %v93, %v94
    %v97 = vadd.f32 %v78, %v95
    %v98 = vrot.slane %v79, 2
    %v100 = vadd.f32 %v97, %v98
    %v101 = vadd.f32 %v100, 0.001
    %v102 = vrcp.pop %v101
    %v103 = vmul.f32 %v90, %v102
    %v104 = vld [vmem:[%s2] sm:$0xff]
    %v105 = vld [vmem:[%s2 + $0x8] sm:$0x3]
    %107 = vset.pattern.permute.xlu0 5
    %108 = vperm.xlu0 %107, %v104
    %v109 = vpop.permute.xlu0 %108
    %112 = vset.pattern.permute.xlu0 5
    %113 = vperm.xlu0 %112, %v105
    %v114 = vpop.permute.xlu0 %113
    %vm116 = vcmask 39936
    %v117 = vsel %vm116, %v104, 0
    %v119 = vsel %vm116, %v105, 0
    %v122 = vsel %vm26, %v103, 0
    %124 = vmatprep.subr.mxu0 0.0
    %125 = vmatpush1.msra.mxu0 0.0
    %126 = vmatprep.subr.mxu0 0.0
    %127 = vmatpush1.msra.mxu0 0.0
    %128 = vmatprep.subr.mxu0 0.0
    %129 = vmatpush1.msra.mxu0 0.0
    %130 = vmatprep.subr.mxu0 0.0
    %131 = vmatpush1.msra.mxu0 0.0
    %132 = vmatprep.subr.mxu0 0.0
    %133 = vmatpush1.msra.mxu0 0.0
    %134 = vmatprep.subr.mxu0 0.0
    %135 = vmatpush1.msra.mxu0 0.0
    %136 = vmatprep.subr.mxu0 0.0
    %137 = vmatpush1.msra.mxu0 0.0
    %138 = vmatprep.subr.mxu0 0.0
    %139 = vmatpush1.msra.mxu0 0.0
    %140 = vmatprep.subr.mxu0 0.0
    %141 = vmatpush1.msra.mxu0 0.0
    %142 = vmatprep.subr.mxu0 0.0
    %143 = vmatpush1.msra.mxu0 0.0
    %144 = vmatprep.subr.mxu0 0.0
    %145 = vmatpush1.msra.mxu0 0.0
    %146 = vmatprep.subr.mxu0 0.0
    %147 = vmatpush1.msra.mxu0 0.0
    %148 = vmatprep.subr.mxu0 0.0
    %149 = vmatpush1.msra.mxu0 0.0
    %150 = vmatprep.subr.mxu0 0.0
    %151 = vmatpush1.msra.mxu0 0.0
    %152 = vmatprep.subr.mxu0 0.0
    %153 = vmatpush1.msra.mxu0 0.0
    %154 = vmatprep.subr.mxu0 0.0
    %155 = vmatpush1.msra.mxu0 %v122
    %156 = vmatprep.subr.mxu0 0.0
    %157 = vmatpush2.msra.mxu0 0.0
    %158 = vmatprep.subr.mxu0 0.0
    %159 = vmatpush2.msra.mxu0 0.0
    %160 = vmatprep.subr.mxu0 0.0
    %161 = vmatpush2.msra.mxu0 0.0
    %162 = vmatprep.subr.mxu0 0.0
    %163 = vmatpush2.msra.mxu0 0.0
    %164 = vmatprep.subr.mxu0 0.0
    %165 = vmatpush2.msra.mxu0 0.0
    %166 = vmatprep.subr.mxu0 0.0
    %167 = vmatpush2.msra.mxu0 0.0
    %168 = vmatprep.subr.mxu0 0.0
    %169 = vmatpush2.msra.mxu0 0.0
    %170 = vmatprep.subr.mxu0 0.0
    %171 = vmatpush2.msra.mxu0 0.0
    %172 = vmatprep.subr.mxu0 0.0
    %173 = vmatpush2.msra.mxu0 0.0
    %174 = vmatprep.subr.mxu0 0.0
    %175 = vmatpush2.msra.mxu0 0.0
    %176 = vmatprep.subr.mxu0 0.0
    %177 = vmatpush2.msra.mxu0 0.0
    %178 = vmatprep.subr.mxu0 0.0
    %179 = vmatpush2.msra.mxu0 0.0
    %180 = vmatprep.subr.mxu0 0.0
    %181 = vmatpush2.msra.mxu0 0.0
    %182 = vmatprep.subr.mxu0 0.0
    %183 = vmatpush2.msra.mxu0 0.0
    %184 = vmatprep.subr.mxu0 0.0
    %185 = vmatpush2.msra.mxu0 0.0
    %186 = vmatprep.subr.mxu0 0.0
    %187 = vmatpush2.msra.mxu0 0.0
    %188 = vmatprep.mubr.f32.mxu0 0.0
    %189 = vmatmul.mubr.f32.gmra.mxu0 %v117
    %v190 = vpop.f32.mrf.mxu0
    %v191 = vadd.f32 %v109, %v190
    %v192 = vpop.f32.mrf.mxu0
    %193 = vmatprep.mubr.f32.mxu0 0.0
    %194 = vmatmul.mubr.f32.gmra.mxu0 %v119
    %v195 = vpop.f32.mrf.mxu0
    %v196 = vadd.f32 %v114, %v195
    %v197 = vpop.f32.mrf.mxu0
    %198 = vdwg.mxu0
    %v199 = vmax.f32 %v191, 0.0
    %v200 = vmax.f32 %v196, 0.0
    %v201 = vld [vmem:[%s3] sm:$0x1f]
    %203 = vset.pattern.permute.xlu0 10
    %204 = vperm.xlu0 %203, %v201
    %v205 = vpop.permute.xlu0 %204
    %vm207 = vcmask 80896
    %v208 = vsel %vm207, %v201, 0
    %v211 = vsel %vm28, %v200, 0
    %213 = vmatprep.subr.mxu0 0.0
    %214 = vmatpush1.msra.mxu0 0.0
    %215 = vmatprep.subr.mxu0 0.0
    %216 = vmatpush1.msra.mxu0 0.0
    %217 = vmatprep.subr.mxu0 0.0
    %218 = vmatpush1.msra.mxu0 0.0
    %219 = vmatprep.subr.mxu0 0.0
    %220 = vmatpush1.msra.mxu0 0.0
    %221 = vmatprep.subr.mxu0 0.0
    %222 = vmatpush1.msra.mxu0 0.0
    %223 = vmatprep.subr.mxu0 0.0
    %224 = vmatpush1.msra.mxu0 0.0
    %225 = vmatprep.subr.mxu0 0.0
    %226 = vmatpush1.msra.mxu0 0.0
    %227 = vmatprep.subr.mxu0 0.0
    %228 = vmatpush1.msra.mxu0 0.0
    %229 = vmatprep.subr.mxu0 0.0
    %230 = vmatpush1.msra.mxu0 0.0
    %231 = vmatprep.subr.mxu0 0.0
    %232 = vmatpush1.msra.mxu0 0.0
    %233 = vmatprep.subr.mxu0 0.0
    %234 = vmatpush1.msra.mxu0 0.0
    %235 = vmatprep.subr.mxu0 0.0
    %236 = vmatpush1.msra.mxu0 0.0
    %237 = vmatprep.subr.mxu0 0.0
    %238 = vmatpush1.msra.mxu0 0.0
    %239 = vmatprep.subr.mxu0 0.0
    %240 = vmatpush1.msra.mxu0 0.0
    %241 = vmatprep.subr.mxu0 0.0
    %242 = vmatpush1.msra.mxu0 %v211
    %243 = vmatprep.subr.mxu0 0.0
    %244 = vmatpush1.msra.mxu0 %v199
    %245 = vmatprep.subr.mxu0 0.0
    %246 = vmatpush2.msra.mxu0 0.0
    %247 = vmatprep.subr.mxu0 0.0
    %248 = vmatpush2.msra.mxu0 0.0
    %249 = vmatprep.subr.mxu0 0.0
    %250 = vmatpush2.msra.mxu0 0.0
    %251 = vmatprep.subr.mxu0 0.0
    %252 = vmatpush2.msra.mxu0 0.0
    %253 = vmatprep.subr.mxu0 0.0
    %254 = vmatpush2.msra.mxu0 0.0
    %255 = vmatprep.subr.mxu0 0.0
    %256 = vmatpush2.msra.mxu0 0.0
    %257 = vmatprep.subr.mxu0 0.0
    %258 = vmatpush2.msra.mxu0 0.0
    %259 = vmatprep.subr.mxu0 0.0
    %260 = vmatpush2.msra.mxu0 0.0
    %261 = vmatprep.subr.mxu0 0.0
    %262 = vmatpush2.msra.mxu0 0.0
    %263 = vmatprep.subr.mxu0 0.0
    %264 = vmatpush2.msra.mxu0 0.0
    %265 = vmatprep.subr.mxu0 0.0
    %266 = vmatpush2.msra.mxu0 0.0
    %267 = vmatprep.subr.mxu0 0.0
    %268 = vmatpush2.msra.mxu0 0.0
    %269 = vmatprep.subr.mxu0 0.0
    %270 = vmatpush2.msra.mxu0 0.0
    %271 = vmatprep.subr.mxu0 0.0
    %272 = vmatpush2.msra.mxu0 0.0
    %273 = vmatprep.subr.mxu0 0.0
    %274 = vmatpush2.msra.mxu0 0.0
    %275 = vmatprep.subr.mxu0 0.0
    %276 = vmatpush2.msra.mxu0 0.0
    %277 = vmatprep.mubr.f32.mxu0 0.0
    %278 = vmatmul.mubr.f32.gmra.mxu0 %v208
    %v279 = vpop.f32.mrf.mxu0
    %v280 = vadd.f32 %v205, %v279
    %v281 = vpop.f32.mrf.mxu0
    %282 = vdwg.mxu0
    %v283 = vsel %vm26, %v280, -inf
    %v284 = vrot.slane %v283, 4
    %v285 = vmax.f32 %v283, %v284
    %v286 = vrot.slane %v285, 2
    %v287 = vmax.f32 %v285, %v286
    %v288 = vrot.slane %v287, 1
    %v289 = vmax.f32 %v287, %v288
    %v290 = vsub.f32 %v280, %v289
    %v291 = vmul.f32 %v290, 1.442695
    %v292 = vpow.pop %v291
    %v293 = vsel %vm26, %v292, 0.0
    %v294 = vrot.slane %v293, 4
    %v295 = vadd.f32 %v293, %v294
    %v296 = vrot.slane %v295, 2
    %v297 = vadd.f32 %v295, %v296
    %v298 = vrot.slane %v297, 1
    %v299 = vadd.f32 %v297, %v298
    %v300 = vrcp.pop %v299
    %v301 = vmul.f32 1.0, %v300
    %v302 = vmul.f32 %v292, %v301
    %303 = vst [vmem:[#allocation2] sm:$0x1f] %v302
    // Predicated region
    $region18: #{tpu_custom_call.1} parent=1 // pred_check
      _
    $region19: #{tpu_custom_call.1} parent=1 // pred_check_branch
      %305 = sbr.rel (0) target = $region21
    $region20: #{tpu_custom_call.1} parent=1 // pred_region
      %s307 = ssub.s32 128, 128
      %308 = vsyncadd [#allocation3], %s307
      %s310 = sshll.u32 [#allocation2], 4
      %s311 = int_to_ptr.vmem [resolvable:$true] %s310
      %313 = dma.vmem_to_hbm [thread:$0]  %s311, 128, %s4, [#allocation3]
    $region21: #{tpu_custom_call.1} parent=1 // pred_fallthru
      _
    // Predicated region
    $region22: #{tpu_custom_call.1} parent=1 // pred_check
      _
    $region23: #{tpu_custom_call.1} parent=1 // pred_check_branch
      %315 = sbr.rel (0) target = $region25
    $region24: #{tpu_custom_call.1} parent=1 // pred_region
      %316 = dma.done [#allocation3], 128
    $region25: #{tpu_custom_call.1} parent=1 // pred_fallthru
      _
    %317 = vsyncpa [#allocation3], 1

</llo_original>
